<compile_context>
chip_gen: v7x
topology: tpu7x:2x2x1
jax: 0.10.0
libtpu: 0.0.40
codegen_flags: <defaults>
</compile_context>

<pallas_src>
import numpy as np
import jax
import jax.numpy as jnp
from jax.experimental import pallas as pl
from jax.experimental.pallas import tpu as pltpu


def build_relative_position_index(window_size):
    """Host-side replica of the PyTorch __init__ buffer construction."""
    Wh, Ww = window_size
    num_relative_distance = (2 * Wh - 1) * (2 * Ww - 1) + 3
    coords_h = np.arange(Wh)
    coords_w = np.arange(Ww)
    coords = np.stack(np.meshgrid(coords_h, coords_w, indexing="ij"))   # (2, Wh, Ww)
    coords_flatten = coords.reshape(2, -1)                              # (2, Wh*Ww)
    relative_coords = coords_flatten[:, :, None] - coords_flatten[:, None, :]
    relative_coords = relative_coords.transpose(1, 2, 0).copy()         # (Wh*Ww, Wh*Ww, 2)
    relative_coords[:, :, 0] += Wh - 1
    relative_coords[:, :, 1] += Ww - 1
    relative_coords[:, :, 0] *= 2 * Ww - 1
    N = Wh * Ww + 1
    rpi = np.zeros((N, N), dtype=np.int64)
    rpi[1:, 1:] = relative_coords.sum(-1)
    rpi[0, 0:] = num_relative_distance - 3
    rpi[0:, 0] = num_relative_distance - 2
    rpi[0, 0] = num_relative_distance - 1
    return rpi, num_relative_distance


def _rpb_kernel(table_t_ref, onehot_ref, out_ref):
    """table_t_ref: (H, D_pad) f32, onehot_ref: (D_pad, M_pad) f32,
    out_ref: (H, M_pad).  Single VMEM block, single MXU matmul."""
    out_ref[...] = jnp.dot(
        table_t_ref[...], onehot_ref[...],
        precision=jax.lax.Precision.HIGHEST,      # exact f32 gather semantics
        preferred_element_type=jnp.float32,
    ).astype(out_ref.dtype)


def make_relative_position_bias(window_size, num_heads, *, out_dtype=None):
    """Returns a jitted forward(table) -> (num_heads, N, N).

    All static preprocessing (index buffer, one-hot matrix, padding sizes) is
    done once here, mirroring the PyTorch module's __init__.
    """
    Wh, Ww = window_size
    N = Wh * Ww + 1
    M = N * N
    rpi, num_relative_distance = build_relative_position_index(window_size)

    # Pad the reduction dim to a multiple of 64 (MXU K alignment) and the
    # output lane dim to a multiple of 128 (unmasked lane-dense stores).
    d_pad = ((num_relative_distance + 63) // 64) * 64
    m_pad = ((M + 127) // 128) * 128

    # Static one-hot gather matrix, built once on the host.
    idx_flat = np.asarray(rpi).reshape(-1).astype(np.int32)            # (M,)
    onehot_np = np.zeros((d_pad, m_pad), dtype=np.float32)
    onehot_np[idx_flat, np.arange(M)] = 1.0                            # cols >= M stay zero
    onehot = jnp.asarray(onehot_np)

    H = num_heads

    @jax.jit
    def forward(table):
        """table: (num_relative_distance, num_heads)."""
        dtype = out_dtype if out_dtype is not None else table.dtype
        # Per-call glue (tiny, fuses under jit): pad D -> d_pad, transpose.
        table_t = jnp.pad(
            table.astype(jnp.float32),
            ((0, d_pad - table.shape[0]), (0, 0)),
        ).T                                                            # (H, d_pad)

        out = pl.pallas_call(
            _rpb_kernel,
            out_shape=jax.ShapeDtypeStruct((H, m_pad), dtype),
            in_specs=[
                pl.BlockSpec(memory_space=pltpu.MemorySpace.VMEM),     # table^T, whole block
                pl.BlockSpec(memory_space=pltpu.MemorySpace.VMEM),     # one-hot, whole block
            ],
            out_specs=pl.BlockSpec(memory_space=pltpu.MemorySpace.VMEM),
            cost_estimate=pl.CostEstimate(
                flops=2 * H * d_pad * m_pad,
                transcendentals=0,
                bytes_accessed=(H * d_pad + d_pad * m_pad + H * m_pad) * 4,
            ),
        )(table_t, onehot)

        # Drop zero padding and reshape: (H, N*N) -> (H, N, N)  (== permute(2,0,1))
        return out[:, :M].reshape(H, N, N)

    return forward


if __name__ == "__main__":
    # Small shapes consistent with the module: window_size=(4, 4), num_heads=32.
    window_size = (4, 4)
    num_heads = 32

    rpi, num_relative_distance = build_relative_position_index(window_size)
    N = window_size[0] * window_size[1] + 1

    key = jax.random.PRNGKey(0)
    # The real module inits the table to zeros; use random values for a
    # meaningful numerical check.
    table = 0.02 * jax.random.normal(
        key, (num_relative_distance, num_heads), dtype=jnp.float32)

    forward = make_relative_position_bias(window_size, num_heads)
    out = forward(table)
    out = jax.block_until_ready(out)

    # Plain-JAX reference of RelativePositionBias.forward.
    idx_flat = jnp.asarray(rpi.reshape(-1), dtype=jnp.int32)
    ref = jnp.take(table, idx_flat, axis=0).reshape(N, N, num_heads)
    ref = jnp.transpose(ref, (2, 0, 1))

    assert out.shape == (num_heads, N, N)
    assert jnp.allclose(out, ref, atol=1e-6, rtol=1e-6)

    print("KERNEL_OK")
</pallas_src>

<mosaic_0001>
module attributes {stable_mosaic.version = 11 : i64} {
  func.func @_rpb_kernel(%arg0: memref<32x64xf32, #tpu.memory_space<vmem>>, %arg1: memref<64x384xf32, #tpu.memory_space<vmem>>, %arg2: memref<32x384xf32, #tpu.memory_space<vmem>>) attributes {dimension_semantics = [], scalar_prefetch = 0 : i64, scratch_operands = 0 : i64, tpu.core_type = #tpu.core_type<tc>} {
    %c0 = arith.constant 0 : index
    %c0_0 = arith.constant 0 : index
    %0 = vector.load %arg0[%c0, %c0_0] : memref<32x64xf32, #tpu.memory_space<vmem>>, vector<32x64xf32>
    %c0_1 = arith.constant 0 : index
    %c0_2 = arith.constant 0 : index
    %1 = vector.load %arg1[%c0_1, %c0_2] : memref<64x384xf32, #tpu.memory_space<vmem>>, vector<64x384xf32>
    %cst = arith.constant dense<0.000000e+00> : vector<32x384xf32>
    %2 = tpu.matmul %0, %1, %cst {dimension_numbers = #tpu.dot_dimension_numbers<[1], [0], [0], [1], [0, 0, 1, 1], [], []>, precision = #tpu.contract_precision<fp32>} : vector<32x64xf32>, vector<64x384xf32>, vector<32x384xf32> -> vector<32x384xf32>
    %c0_3 = arith.constant 0 : index
    %c0_4 = arith.constant 0 : index
    %3 = vector.load %arg2[%c0_3, %c0_4] : memref<32x384xf32, #tpu.memory_space<vmem>>, vector<32x384xf32>
    tpu.vector_store %arg2[%c0_3, %c0_4], %2 {strides = array<i32>} : memref<32x384xf32, #tpu.memory_space<vmem>>, vector<32x384xf32>,
    return
  }
}

</mosaic_0001>

<llo_original>
// kernel: forward.1
$region0: #{forward.1}
  #allocation0 [shape = 'u32[]', space=smem, size = 0x4, offset = 0x4, fixed_abs, tag = 'smem constant byte address 0x4 - core index']
  #allocation1 [shape = 'u32[144,128]{1,0:T(1,128)}', space=vmem, size = 0x12000, scoped, tag = 'internal scratch']
  %s0 = inlined_call_operand.vmem [shape: f32[32,64], index: 0, kind: input, shape index: {}]
  %s1 = inlined_call_operand.hbm [shape: f32[64,384], index: 1, kind: input, shape index: {}]
  %s2 = inlined_call_operand.vmem [shape: f32[32,384], index: 2, kind: output, shape index: {}]
  %s3 = sld [smem:[#allocation0]]
  $region22: #{forward.1} parent=0
    _
  %s5 = ssub.s32 1, %s3
  %s6 = scalar_select 0, %s5, %s3
  $region1: #{forward.1} parent=0
    #allocation2 [shape = 'u8[98304]{0}', space=vmem, size = 0x18000, scoped, tag = 'input window, operand 1, single buffered']
    #allocation3 [shape = 's32[1]{0}', space=sflag, size = 0x4, scoped, tag = 'scoped memory for forward.1']
    %7 = vsyncpa [#allocation3], 0
    // Predicated region
    $region2: #{forward.1} parent=1 // pred_check
      _
    $region3: #{forward.1} parent=1 // pred_check_branch
      %9 = sbr.rel (0) target = $region5
    $region4: #{forward.1} parent=1 // pred_region
      _
    $region5: #{forward.1} parent=1 // pred_fallthru
      _
    // Predicated region
    $region6: #{forward.1} parent=1 // pred_check
      _
    $region7: #{forward.1} parent=1 // pred_check_branch
      %11 = sbr.rel (0) target = $region9
    $region8: #{forward.1} parent=1 // pred_region
      %s13 = ssub.s32 3072, 3072
      %14 = vsyncadd [#allocation3], %s13
      %s15 = sshll.u32 [#allocation2], 4
      %s16 = int_to_ptr.vmem [resolvable:$true] %s15
      %21 = dma.hbm_to_vmem [thread:$0]  %s1, 3072, %s16, [#allocation3], 384, 384, 24
    $region9: #{forward.1} parent=1 // pred_fallthru
      _
    // Predicated region
    $region10: #{forward.1} parent=1 // pred_check
      _
    $region11: #{forward.1} parent=1 // pred_check_branch
      %23 = sbr.rel (0) target = $region13
    $region12: #{forward.1} parent=1 // pred_region
      %24 = dma.done [#allocation3], 3072
    $region13: #{forward.1} parent=1 // pred_fallthru
      _
    %v25 = vld [vmem:[%s0] sm:$0xff]
    %v26 = vld [vmem:[%s0 + $0x8] sm:$0xff]
    %v27 = vld [vmem:[%s0 + $0x10] sm:$0xff]
    %v28 = vld [vmem:[%s0 + $0x18] sm:$0xff]
    %v29 = vld [vmem:[#allocation2] sm:$0xff]
    %v30 = vld [vmem:[#allocation2 + $0x8] sm:$0xff]
    %v31 = vld [vmem:[#allocation2 + $0x10] sm:$0xff]
    %v32 = vld [vmem:[#allocation2 + $0x18] sm:$0xff]
    %v33 = vld [vmem:[#allocation2 + $0x20] sm:$0xff]
    %v34 = vld [vmem:[#allocation2 + $0x28] sm:$0xff]
    %v35 = vld [vmem:[#allocation2 + $0x30] sm:$0xff]
    %v36 = vld [vmem:[#allocation2 + $0x38] sm:$0xff]
    %v37 = vld [vmem:[#allocation2 + $0x40] sm:$0xff]
    %v38 = vld [vmem:[#allocation2 + $0x48] sm:$0xff]
    %v39 = vld [vmem:[#allocation2 + $0x50] sm:$0xff]
    %v40 = vld [vmem:[#allocation2 + $0x58] sm:$0xff]
    %v41 = vld [vmem:[#allocation2 + $0x60] sm:$0xff]
    %v42 = vld [vmem:[#allocation2 + $0x68] sm:$0xff]
    %v43 = vld [vmem:[#allocation2 + $0x70] sm:$0xff]
    %v44 = vld [vmem:[#allocation2 + $0x78] sm:$0xff]
    %v45 = vld [vmem:[#allocation2 + $0x80] sm:$0xff]
    %v46 = vld [vmem:[#allocation2 + $0x88] sm:$0xff]
    %v47 = vld [vmem:[#allocation2 + $0x90] sm:$0xff]
    %v48 = vld [vmem:[#allocation2 + $0x98] sm:$0xff]
    %v49 = vld [vmem:[#allocation2 + $0xa0] sm:$0xff]
    %v50 = vld [vmem:[#allocation2 + $0xa8] sm:$0xff]
    %v51 = vld [vmem:[#allocation2 + $0xb0] sm:$0xff]
    %v52 = vld [vmem:[#allocation2 + $0xb8] sm:$0xff]
    %vm53 = vcmask 523264
    %v55 = vsel %vm53, %v25, 0
    %v58 = vsel %vm53, %v26, 0
    %v61 = vsel %vm53, %v27, 0
    %v64 = vsel %vm53, %v28, 0
    %v66 = vand.u32 %v30, 4294901760
    %67 = vmatprep.subr.mxu0 %v66
    %v68 = vand.u32 %v29, 4294901760
    %69 = vmatpush1.msra.mxu0 %v68
    %v70 = vand.u32 %v33, 4294901760
    %71 = vmatprep.subr.mxu0 %v70
    %v72 = vand.u32 %v32, 4294901760
    %73 = vmatpush1.msra.mxu0 %v72
    %v74 = vand.u32 %v36, 4294901760
    %75 = vmatprep.subr.mxu0 %v74
    %v76 = vand.u32 %v35, 4294901760
    %77 = vmatpush1.msra.mxu0 %v76
    %v78 = vand.u32 %v39, 4294901760
    %79 = vmatprep.subr.mxu0 %v78
    %v80 = vand.u32 %v38, 4294901760
    %81 = vmatpush1.msra.mxu0 %v80
    %v82 = vand.u32 %v42, 4294901760
    %83 = vmatprep.subr.mxu0 %v82
    %v84 = vand.u32 %v41, 4294901760
    %85 = vmatpush1.msra.mxu0 %v84
    %v86 = vand.u32 %v45, 4294901760
    %87 = vmatprep.subr.mxu0 %v86
    %v88 = vand.u32 %v44, 4294901760
    %89 = vmatpush1.msra.mxu0 %v88
    %v90 = vand.u32 %v48, 4294901760
    %91 = vmatprep.subr.mxu0 %v90
    %v92 = vand.u32 %v47, 4294901760
    %93 = vmatpush1.msra.mxu0 %v92
    %v94 = vand.u32 %v51, 4294901760
    %95 = vmatprep.subr.mxu0 %v94
    %v96 = vand.u32 %v50, 4294901760
    %97 = vmatpush1.msra.mxu0 %v96
    %98 = vmatprep.subr.mxu0 0.0
    %99 = vmatpush1.msra.mxu0 0.0
    %100 = vmatprep.subr.mxu0 0.0
    %101 = vmatpush1.msra.mxu0 0.0
    %102 = vmatprep.subr.mxu0 0.0
    %103 = vmatpush1.msra.mxu0 0.0
    %104 = vmatprep.subr.mxu0 0.0
    %105 = vmatpush1.msra.mxu0 0.0
    %106 = vmatprep.subr.mxu0 0.0
    %107 = vmatpush1.msra.mxu0 0.0
    %108 = vmatprep.subr.mxu0 0.0
    %109 = vmatpush1.msra.mxu0 0.0
    %110 = vmatprep.subr.mxu0 0.0
    %111 = vmatpush1.msra.mxu0 0.0
    %112 = vmatprep.subr.mxu0 0.0
    %113 = vmatpush1.msra.mxu0 0.0
    %114 = vmatprep.subr.mxu0 0.0
    %115 = vmatpush1.msra.mxu0 0.0
    %116 = vmatprep.subr.mxu0 0.0
    %117 = vmatpush1.msra.mxu0 0.0
    %118 = vmatprep.subr.mxu0 0.0
    %119 = vmatpush1.msra.mxu0 0.0
    %120 = vmatprep.subr.mxu0 0.0
    %121 = vmatpush1.msra.mxu0 0.0
    %122 = vmatprep.subr.mxu0 0.0
    %123 = vmatpush1.msra.mxu0 0.0
    %124 = vmatprep.subr.mxu0 0.0
    %125 = vmatpush1.msra.mxu0 0.0
    %126 = vmatprep.subr.mxu0 0.0
    %127 = vmatpush1.msra.mxu0 0.0
    %128 = vmatprep.subr.mxu0 0.0
    %129 = vmatpush1.msra.mxu0 0.0
    %130 = vmatprep.subr.mxu0 0.0
    %131 = vmatpush1.msra.mxu0 0.0
    %132 = vmatprep.subr.mxu0 0.0
    %133 = vmatpush1.msra.mxu0 0.0
    %134 = vmatprep.subr.mxu0 0.0
    %135 = vmatpush1.msra.mxu0 0.0
    %136 = vmatprep.subr.mxu0 0.0
    %137 = vmatpush1.msra.mxu0 0.0
    %138 = vmatprep.subr.mxu0 0.0
    %139 = vmatpush1.msra.mxu0 0.0
    %140 = vmatprep.subr.mxu0 0.0
    %141 = vmatpush1.msra.mxu0 0.0
    %142 = vmatprep.subr.mxu0 0.0
    %143 = vmatpush1.msra.mxu0 0.0
    %144 = vmatprep.subr.mxu0 0.0
    %145 = vmatpush1.msra.mxu0 0.0
    %146 = vmatprep.mubr.f32.mxu0 0.0
    %v147 = vand.u32 %v55, 4294901760
    %v148 = vsub.f32 %v55, %v147
    %v149 = vand.u32 %v148, 4294901760
    %v150 = vsub.f32 %v148, %v149
    %v151 = vand.u32 %v150, 4294901760
    %152 = vmatmul.mubr.f32.gmra.mrb[0].mxu0 %v151
    %v153 = vpop.f32.mrb[0].mxu0
    %v154 = vadd.f32 0.0, %v153
    %v155 = vpop.f32.mrb[0].mxu0
    %v156 = vadd.f32 0.0, %v155
    %157 = vmatprep.mubr.f32.mxu0 0.0
    %v158 = vand.u32 %v58, 4294901760
    %v159 = vsub.f32 %v58, %v158
    %v160 = vand.u32 %v159, 4294901760
    %v161 = vsub.f32 %v159, %v160
    %v162 = vand.u32 %v161, 4294901760
    %163 = vmatmul.mubr.f32.gmra.mrb[0].mxu0 %v162
    %v164 = vpop.f32.mrb[0].mxu0
    %v165 = vadd.f32 0.0, %v164
    %v166 = vpop.f32.mrb[0].mxu0
    %v167 = vadd.f32 0.0, %v166
    %168 = vmatprep.mubr.f32.mxu0 0.0
    %v169 = vand.u32 %v61, 4294901760
    %v170 = vsub.f32 %v61, %v169
    %v171 = vand.u32 %v170, 4294901760
    %v172 = vsub.f32 %v170, %v171
    %v173 = vand.u32 %v172, 4294901760
    %174 = vmatmul.mubr.f32.gmra.mrb[0].mxu0 %v173
    %v175 = vpop.f32.mrb[0].mxu0
    %v176 = vadd.f32 0.0, %v175
    %v177 = vpop.f32.mrb[0].mxu0
    %v178 = vadd.f32 0.0, %v177
    %179 = vmatprep.mubr.f32.mxu0 0.0
    %v180 = vand.u32 %v64, 4294901760
    %v181 = vsub.f32 %v64, %v180
    %v182 = vand.u32 %v181, 4294901760
    %v183 = vsub.f32 %v181, %v182
    %v184 = vand.u32 %v183, 4294901760
    %185 = vmatmul.mubr.f32.gmra.mrb[0].mxu0 %v184
    %v186 = vpop.f32.mrb[0].mxu0
    %v187 = vadd.f32 0.0, %v186
    %v188 = vpop.f32.mrb[0].mxu0
    %v189 = vadd.f32 0.0, %v188
    %190 = vdwg.mxu0
    %v191 = vand.u32 %v30, 4294901760
    %v192 = vsub.f32 %v30, %v191
    %v193 = vand.u32 %v192, 4294901760
    %v194 = vsub.f32 %v192, %v193
    %v195 = vand.u32 %v194, 4294901760
    %196 = vmatprep.subr.mxu0 %v195
    %v197 = vand.u32 %v29, 4294901760
    %v198 = vsub.f32 %v29, %v197
    %v199 = vand.u32 %v198, 4294901760
    %v200 = vsub.f32 %v198, %v199
    %v201 = vand.u32 %v200, 4294901760
    %202 = vmatpush1.msra.mxu0 %v201
    %v203 = vand.u32 %v33, 4294901760
    %v204 = vsub.f32 %v33, %v203
    %v205 = vand.u32 %v204, 4294901760
    %v206 = vsub.f32 %v204, %v205
    %v207 = vand.u32 %v206, 4294901760
    %208 = vmatprep.subr.mxu0 %v207
    %v209 = vand.u32 %v32, 4294901760
    %v210 = vsub.f32 %v32, %v209
    %v211 = vand.u32 %v210, 4294901760
    %v212 = vsub.f32 %v210, %v211
    %v213 = vand.u32 %v212, 4294901760
    %214 = vmatpush1.msra.mxu0 %v213
    %v215 = vand.u32 %v36, 4294901760
    %v216 = vsub.f32 %v36, %v215
    %v217 = vand.u32 %v216, 4294901760
    %v218 = vsub.f32 %v216, %v217
    %v219 = vand.u32 %v218, 4294901760
    %220 = vmatprep.subr.mxu0 %v219
    %v221 = vand.u32 %v35, 4294901760
    %v222 = vsub.f32 %v35, %v221
    %v223 = vand.u32 %v222, 4294901760
    %v224 = vsub.f32 %v222, %v223
    %v225 = vand.u32 %v224, 4294901760
    %226 = vmatpush1.msra.mxu0 %v225
    %v227 = vand.u32 %v39, 4294901760
    %v228 = vsub.f32 %v39, %v227
    %v229 = vand.u32 %v228, 4294901760
    %v230 = vsub.f32 %v228, %v229
    %v231 = vand.u32 %v230, 4294901760
    %232 = vmatprep.subr.mxu0 %v231
    %v233 = vand.u32 %v38, 4294901760
    %v234 = vsub.f32 %v38, %v233
    %v235 = vand.u32 %v234, 4294901760
    %v236 = vsub.f32 %v234, %v235
    %v237 = vand.u32 %v236, 4294901760
    %238 = vmatpush1.msra.mxu0 %v237
    %v239 = vand.u32 %v42, 4294901760
    %v240 = vsub.f32 %v42, %v239
    %v241 = vand.u32 %v240, 4294901760
    %v242 = vsub.f32 %v240, %v241
    %v243 = vand.u32 %v242, 4294901760
    %244 = vmatprep.subr.mxu0 %v243
    %v245 = vand.u32 %v41, 4294901760
    %v246 = vsub.f32 %v41, %v245
    %v247 = vand.u32 %v246, 4294901760
    %v248 = vsub.f32 %v246, %v247
    %v249 = vand.u32 %v248, 4294901760
    %250 = vmatpush1.msra.mxu0 %v249
    %v251 = vand.u32 %v45, 4294901760
    %v252 = vsub.f32 %v45, %v251
    %v253 = vand.u32 %v252, 4294901760
    %v254 = vsub.f32 %v252, %v253
    %v255 = vand.u32 %v254, 4294901760
    %256 = vmatprep.subr.mxu0 %v255
    %v257 = vand.u32 %v44, 4294901760
    %v258 = vsub.f32 %v44, %v257
    %v259 = vand.u32 %v258, 4294901760
    %v260 = vsub.f32 %v258, %v259
    %v261 = vand.u32 %v260, 4294901760
    %262 = vmatpush1.msra.mxu0 %v261
    %v263 = vand.u32 %v48, 4294901760
    %v264 = vsub.f32 %v48, %v263
    %v265 = vand.u32 %v264, 4294901760
    %v266 = vsub.f32 %v264, %v265
    %v267 = vand.u32 %v266, 4294901760
    %268 = vmatprep.subr.mxu0 %v267
    %v269 = vand.u32 %v47, 4294901760
    %v270 = vsub.f32 %v47, %v269
    %v271 = vand.u32 %v270, 4294901760
    %v272 = vsub.f32 %v270, %v271
    %v273 = vand.u32 %v272, 4294901760
    %274 = vmatpush1.msra.mxu0 %v273
    %v275 = vand.u32 %v51, 4294901760
    %v276 = vsub.f32 %v51, %v275
    %v277 = vand.u32 %v276, 4294901760
    %v278 = vsub.f32 %v276, %v277
    %v279 = vand.u32 %v278, 4294901760
    %280 = vmatprep.subr.mxu0 %v279
    %v281 = vand.u32 %v50, 4294901760
    %v282 = vsub.f32 %v50, %v281
    %v283 = vand.u32 %v282, 4294901760
    %v284 = vsub.f32 %v282, %v283
    %v285 = vand.u32 %v284, 4294901760
    %286 = vmatpush1.msra.mxu0 %v285
    %287 = vmatprep.subr.mxu0 0.0
    %288 = vmatpush1.msra.mxu0 0.0
    %289 = vmatprep.subr.mxu0 0.0
    %290 = vmatpush1.msra.mxu0 0.0
    %291 = vmatprep.subr.mxu0 0.0
    %292 = vmatpush1.msra.mxu0 0.0
    %293 = vmatprep.subr.mxu0 0.0
    %294 = vmatpush1.msra.mxu0 0.0
    %295 = vmatprep.subr.mxu0 0.0
    %296 = vmatpush1.msra.mxu0 0.0
    %297 = vmatprep.subr.mxu0 0.0
    %298 = vmatpush1.msra.mxu0 0.0
    %299 = vmatprep.subr.mxu0 0.0
    %300 = vmatpush1.msra.mxu0 0.0
    %301 = vmatprep.subr.mxu0 0.0
    %302 = vmatpush1.msra.mxu0 0.0
    %303 = vmatprep.subr.mxu0 0.0
    %304 = vmatpush1.msra.mxu0 0.0
    %305 = vmatprep.subr.mxu0 0.0
    %306 = vmatpush1.msra.mxu0 0.0
    %307 = vmatprep.subr.mxu0 0.0
    %308 = vmatpush1.msra.mxu0 0.0
    %309 = vmatprep.subr.mxu0 0.0
    %310 = vmatpush1.msra.mxu0 0.0
    %311 = vmatprep.subr.mxu0 0.0
    %312 = vmatpush1.msra.mxu0 0.0
    %313 = vmatprep.subr.mxu0 0.0
    %314 = vmatpush1.msra.mxu0 0.0
    %315 = vmatprep.subr.mxu0 0.0
    %316 = vmatpush1.msra.mxu0 0.0
    %317 = vmatprep.subr.mxu0 0.0
    %318 = vmatpush1.msra.mxu0 0.0
    %319 = vmatprep.subr.mxu0 0.0
    %320 = vmatpush1.msra.mxu0 0.0
    %321 = vmatprep.subr.mxu0 0.0
    %322 = vmatpush1.msra.mxu0 0.0
    %323 = vmatprep.subr.mxu0 0.0
    %324 = vmatpush1.msra.mxu0 0.0
    %325 = vmatprep.subr.mxu0 0.0
    %326 = vmatpush1.msra.mxu0 0.0
    %327 = vmatprep.subr.mxu0 0.0
    %328 = vmatpush1.msra.mxu0 0.0
    %329 = vmatprep.subr.mxu0 0.0
    %330 = vmatpush1.msra.mxu0 0.0
    %331 = vmatprep.subr.mxu0 0.0
    %332 = vmatpush1.msra.mxu0 0.0
    %333 = vmatprep.subr.mxu0 0.0
    %334 = vmatpush1.msra.mxu0 0.0
    %335 = vmatprep.mubr.f32.mxu0 0.0
    %v336 = vand.u32 %v55, 4294901760
    %337 = vmatmul.mubr.f32.gmra.mrb[0].mxu0 %v336
    %v338 = vpop.f32.mrb[0].mxu0
    %v339 = vadd.f32 %v154, %v338
    %v340 = vpop.f32.mrb[0].mxu0
    %v341 = vadd.f32 %v156, %v340
    %342 = vmatprep.mubr.f32.mxu0 0.0
    %v343 = vand.u32 %v58, 4294901760
    %344 = vmatmul.mubr.f32.gmra.mrb[0].mxu0 %v343
    %v345 = vpop.f32.mrb[0].mxu0
    %v346 = vadd.f32 %v165, %v345
    %v347 = vpop.f32.mrb[0].mxu0
    %v348 = vadd.f32 %v167, %v347
    %349 = vmatprep.mubr.f32.mxu0 0.0
    %v350 = vand.u32 %v61, 4294901760
    %351 = vmatmul.mubr.f32.gmra.mrb[0].mxu0 %v350
    %v352 = vpop.f32.mrb[0].mxu0
    %v353 = vadd.f32 %v176, %v352
    %v354 = vpop.f32.mrb[0].mxu0
    %v355 = vadd.f32 %v178, %v354
    %356 = vmatprep.mubr.f32.mxu0 0.0
    %v357 = vand.u32 %v64, 4294901760
    %358 = vmatmul.mubr.f32.gmra.mrb[0].mxu0 %v357
    %v359 = vpop.f32.mrb[0].mxu0
    %v360 = vadd.f32 %v187, %v359
    %v361 = vpop.f32.mrb[0].mxu0
    %v362 = vadd.f32 %v189, %v361
    %363 = vdwg.mxu0
    %v364 = vand.u32 %v30, 4294901760
    %v365 = vsub.f32 %v30, %v364
    %366 = vmatprep.subr.mxu0 %v365
    %v367 = vand.u32 %v29, 4294901760
    %v368 = vsub.f32 %v29, %v367
    %369 = vmatpush1.msra.mxu0 %v368
    %v370 = vand.u32 %v33, 4294901760
    %v371 = vsub.f32 %v33, %v370
    %372 = vmatprep.subr.mxu0 %v371
    %v373 = vand.u32 %v32, 4294901760
    %v374 = vsub.f32 %v32, %v373
    %375 = vmatpush1.msra.mxu0 %v374
    %v376 = vand.u32 %v36, 4294901760
    %v377 = vsub.f32 %v36, %v376
    %378 = vmatprep.subr.mxu0 %v377
    %v379 = vand.u32 %v35, 4294901760
    %v380 = vsub.f32 %v35, %v379
    %381 = vmatpush1.msra.mxu0 %v380
    %v382 = vand.u32 %v39, 4294901760
    %v383 = vsub.f32 %v39, %v382
    %384 = vmatprep.subr.mxu0 %v383
    %v385 = vand.u32 %v38, 4294901760
    %v386 = vsub.f32 %v38, %v385
    %387 = vmatpush1.msra.mxu0 %v386
    %v388 = vand.u32 %v42, 4294901760
    %v389 = vsub.f32 %v42, %v388
    %390 = vmatprep.subr.mxu0 %v389
    %v391 = vand.u32 %v41, 4294901760
    %v392 = vsub.f32 %v41, %v391
    %393 = vmatpush1.msra.mxu0 %v392
    %v394 = vand.u32 %v45, 4294901760
    %v395 = vsub.f32 %v45, %v394
    %396 = vmatprep.subr.mxu0 %v395
    %v397 = vand.u32 %v44, 4294901760
    %v398 = vsub.f32 %v44, %v397
    %399 = vmatpush1.msra.mxu0 %v398
    %v400 = vand.u32 %v48, 4294901760
    %v401 = vsub.f32 %v48, %v400
    %402 = vmatprep.subr.mxu0 %v401
    %v403 = vand.u32 %v47, 4294901760
    %v404 = vsub.f32 %v47, %v403
    %405 = vmatpush1.msra.mxu0 %v404
    %v406 = vand.u32 %v51, 4294901760
    %v407 = vsub.f32 %v51, %v406
    %408 = vmatprep.subr.mxu0 %v407
    %v409 = vand.u32 %v50, 4294901760
    %v410 = vsub.f32 %v50, %v409
    %411 = vmatpush1.msra.mxu0 %v410
    %412 = vmatprep.subr.mxu0 0.0
    %413 = vmatpush1.msra.mxu0 0.0
    %414 = vmatprep.subr.mxu0 0.0
    %415 = vmatpush1.msra.mxu0 0.0
    %416 = vmatprep.subr.mxu0 0.0
    %417 = vmatpush1.msra.mxu0 0.0
    %418 = vmatprep.subr.mxu0 0.0
    %419 = vmatpush1.msra.mxu0 0.0
    %420 = vmatprep.subr.mxu0 0.0
    %421 = vmatpush1.msra.mxu0 0.0
    %422 = vmatprep.subr.mxu0 0.0
    %423 = vmatpush1.msra.mxu0 0.0
    %424 = vmatprep.subr.mxu0 0.0
    %425 = vmatpush1.msra.mxu0 0.0
    %426 = vmatprep.subr.mxu0 0.0
    %427 = vmatpush1.msra.mxu0 0.0
    %428 = vmatprep.subr.mxu0 0.0
    %429 = vmatpush1.msra.mxu0 0.0
    %430 = vmatprep.subr.mxu0 0.0
    %431 = vmatpush1.msra.mxu0 0.0
    %432 = vmatprep.subr.mxu0 0.0
    %433 = vmatpush1.msra.mxu0 0.0
    %434 = vmatprep.subr.mxu0 0.0
    %435 = vmatpush1.msra.mxu0 0.0
    %436 = vmatprep.subr.mxu0 0.0
    %437 = vmatpush1.msra.mxu0 0.0
    %438 = vmatprep.subr.mxu0 0.0
    %439 = vmatpush1.msra.mxu0 0.0
    %440 = vmatprep.subr.mxu0 0.0
    %441 = vmatpush1.msra.mxu0 0.0
    %442 = vmatprep.subr.mxu0 0.0
    %443 = vmatpush1.msra.mxu0 0.0
    %444 = vmatprep.subr.mxu0 0.0
    %445 = vmatpush1.msra.mxu0 0.0
    %446 = vmatprep.subr.mxu0 0.0
    %447 = vmatpush1.msra.mxu0 0.0
    %448 = vmatprep.subr.mxu0 0.0
    %449 = vmatpush1.msra.mxu0 0.0
    %450 = vmatprep.subr.mxu0 0.0
    %451 = vmatpush1.msra.mxu0 0.0
    %452 = vmatprep.subr.mxu0 0.0
    %453 = vmatpush1.msra.mxu0 0.0
    %454 = vmatprep.subr.mxu0 0.0
    %455 = vmatpush1.msra.mxu0 0.0
    %456 = vmatprep.subr.mxu0 0.0
    %457 = vmatpush1.msra.mxu0 0.0
    %458 = vmatprep.subr.mxu0 0.0
    %459 = vmatpush1.msra.mxu0 0.0
    %460 = vmatprep.mubr.f32.mxu0 0.0
    %v461 = vand.u32 %v55, 4294901760
    %v462 = vsub.f32 %v55, %v461
    %463 = vmatmul.mubr.f32.gmra.mrb[0].mxu0 %v462
    %v464 = vpop.f32.mrb[0].mxu0
    %v465 = vadd.f32 %v339, %v464
    %v466 = vpop.f32.mrb[0].mxu0
    %v467 = vadd.f32 %v341, %v466
    %468 = vmatprep.mubr.f32.mxu0 0.0
    %v469 = vand.u32 %v58, 4294901760
    %v470 = vsub.f32 %v58, %v469
    %471 = vmatmul.mubr.f32.gmra.mrb[0].mxu0 %v470
    %v472 = vpop.f32.mrb[0].mxu0
    %v473 = vadd.f32 %v346, %v472
    %v474 = vpop.f32.mrb[0].mxu0
    %v475 = vadd.f32 %v348, %v474
    %476 = vmatprep.mubr.f32.mxu0 0.0
    %v477 = vand.u32 %v61, 4294901760
    %v478 = vsub.f32 %v61, %v477
    %479 = vmatmul.mubr.f32.gmra.mrb[0].mxu0 %v478
    %v480 = vpop.f32.mrb[0].mxu0
    %v481 = vadd.f32 %v353, %v480
    %v482 = vpop.f32.mrb[0].mxu0
    %v483 = vadd.f32 %v355, %v482
    %484 = vmatprep.mubr.f32.mxu0 0.0
    %v485 = vand.u32 %v64, 4294901760
    %v486 = vsub.f32 %v64, %v485
    %487 = vmatmul.mubr.f32.gmra.mrb[0].mxu0 %v486
    %v488 = vpop.f32.mrb[0].mxu0
    %v489 = vadd.f32 %v360, %v488
    %v490 = vpop.f32.mrb[0].mxu0
    %v491 = vadd.f32 %v362, %v490
    %492 = vdwg.mxu0
    %v493 = vand.u32 %v30, 4294901760
    %494 = vmatprep.subr.mxu0 %v493
    %v495 = vand.u32 %v29, 4294901760
    %496 = vmatpush1.msra.mxu0 %v495
    %v497 = vand.u32 %v33, 4294901760
    %498 = vmatprep.subr.mxu0 %v497
    %v499 = vand.u32 %v32, 4294901760
    %500 = vmatpush1.msra.mxu0 %v499
    %v501 = vand.u32 %v36, 4294901760
    %502 = vmatprep.subr.mxu0 %v501
    %v503 = vand.u32 %v35, 4294901760
    %504 = vmatpush1.msra.mxu0 %v503
    %v505 = vand.u32 %v39, 4294901760
    %506 = vmatprep.subr.mxu0 %v505
    %v507 = vand.u32 %v38, 4294901760
    %508 = vmatpush1.msra.mxu0 %v507
    %v509 = vand.u32 %v42, 4294901760
    %510 = vmatprep.subr.mxu0 %v509
    %v511 = vand.u32 %v41, 4294901760
    %512 = vmatpush1.msra.mxu0 %v511
    %v513 = vand.u32 %v45, 4294901760
    %514 = vmatprep.subr.mxu0 %v513
    %v515 = vand.u32 %v44, 4294901760
    %516 = vmatpush1.msra.mxu0 %v515
    %v517 = vand.u32 %v48, 4294901760
    %518 = vmatprep.subr.mxu0 %v517
    %v519 = vand.u32 %v47, 4294901760
    %520 = vmatpush1.msra.mxu0 %v519
    %v521 = vand.u32 %v51, 4294901760
    %522 = vmatprep.subr.mxu0 %v521
    %v523 = vand.u32 %v50, 4294901760
    %524 = vmatpush1.msra.mxu0 %v523
    %525 = vmatprep.subr.mxu0 0.0
    %526 = vmatpush1.msra.mxu0 0.0
    %527 = vmatprep.subr.mxu0 0.0
    %528 = vmatpush1.msra.mxu0 0.0
    %529 = vmatprep.subr.mxu0 0.0
    %530 = vmatpush1.msra.mxu0 0.0
    %531 = vmatprep.subr.mxu0 0.0
    %532 = vmatpush1.msra.mxu0 0.0
    %533 = vmatprep.subr.mxu0 0.0
    %534 = vmatpush1.msra.mxu0 0.0
    %535 = vmatprep.subr.mxu0 0.0
    %536 = vmatpush1.msra.mxu0 0.0
    %537 = vmatprep.subr.mxu0 0.0
    %538 = vmatpush1.msra.mxu0 0.0
    %539 = vmatprep.subr.mxu0 0.0
    %540 = vmatpush1.msra.mxu0 0.0
    %541 = vmatprep.subr.mxu0 0.0
    %542 = vmatpush1.msra.mxu0 0.0
    %543 = vmatprep.subr.mxu0 0.0
    %544 = vmatpush1.msra.mxu0 0.0
    %545 = vmatprep.subr.mxu0 0.0
    %546 = vmatpush1.msra.mxu0 0.0
    %547 = vmatprep.subr.mxu0 0.0
    %548 = vmatpush1.msra.mxu0 0.0
    %549 = vmatprep.subr.mxu0 0.0
    %550 = vmatpush1.msra.mxu0 0.0
    %551 = vmatprep.subr.mxu0 0.0
    %552 = vmatpush1.msra.mxu0 0.0
    %553 = vmatprep.subr.mxu0 0.0
    %554 = vmatpush1.msra.mxu0 0.0
    %555 = vmatprep.subr.mxu0 0.0
    %556 = vmatpush1.msra.mxu0 0.0
    %557 = vmatprep.subr.mxu0 0.0
    %558 = vmatpush1.msra.mxu0 0.0
    %559 = vmatprep.subr.mxu0 0.0
    %560 = vmatpush1.msra.mxu0 0.0
    %561 = vmatprep.subr.mxu0 0.0
    %562 = vmatpush1.msra.mxu0 0.0
    %563 = vmatprep.subr.mxu0 0.0
    %564 = vmatpush1.msra.mxu0 0.0
    %565 = vmatprep.subr.mxu0 0.0
    %566 = vmatpush1.msra.mxu0 0.0
    %567 = vmatprep.subr.mxu0 0.0
    %568 = vmatpush1.msra.mxu0 0.0
    %569 = vmatprep.subr.mxu0 0.0
    %570 = vmatpush1.msra.mxu0 0.0
    %571 = vmatprep.subr.mxu0 0.0
    %572 = vmatpush1.msra.mxu0 0.0
    %573 = vmatprep.mubr.f32.mxu0 0.0
    %v574 = vand.u32 %v55, 4294901760
    %v575 = vsub.f32 %v55, %v574
    %v576 = vand.u32 %v575, 4294901760
    %577 = vmatmul.mubr.f32.gmra.mrb[0].mxu0 %v576
    %v578 = vpop.f32.mrb[0].mxu0
    %v579 = vadd.f32 %v465, %v578
    %v580 = vpop.f32.mrb[0].mxu0
    %v581 = vadd.f32 %v467, %v580
    %582 = vmatprep.mubr.f32.mxu0 0.0
    %v583 = vand.u32 %v58, 4294901760
    %v584 = vsub.f32 %v58, %v583
    %v585 = vand.u32 %v584, 4294901760
    %586 = vmatmul.mubr.f32.gmra.mrb[0].mxu0 %v585
    %v587 = vpop.f32.mrb[0].mxu0
    %v588 = vadd.f32 %v473, %v587
    %v589 = vpop.f32.mrb[0].mxu0
    %v590 = vadd.f32 %v475, %v589
    %591 = vmatprep.mubr.f32.mxu0 0.0
    %v592 = vand.u32 %v61, 4294901760
    %v593 = vsub.f32 %v61, %v592
    %v594 = vand.u32 %v593, 4294901760
    %595 = vmatmul.mubr.f32.gmra.mrb[0].mxu0 %v594
    %v596 = vpop.f32.mrb[0].mxu0
    %v597 = vadd.f32 %v481, %v596
    %v598 = vpop.f32.mrb[0].mxu0
    %v599 = vadd.f32 %v483, %v598
    %600 = vmatprep.mubr.f32.mxu0 0.0
    %v601 = vand.u32 %v64, 4294901760
    %v602 = vsub.f32 %v64, %v601
    %v603 = vand.u32 %v602, 4294901760
    %604 = vmatmul.mubr.f32.gmra.mrb[0].mxu0 %v603
    %v605 = vpop.f32.mrb[0].mxu0
    %v606 = vadd.f32 %v489, %v605
    %v607 = vpop.f32.mrb[0].mxu0
    %v608 = vadd.f32 %v491, %v607
    %609 = vdwg.mxu0
    %v610 = vand.u32 %v30, 4294901760
    %v611 = vsub.f32 %v30, %v610
    %v612 = vand.u32 %v611, 4294901760
    %613 = vmatprep.subr.mxu0 %v612
    %v614 = vand.u32 %v29, 4294901760
    %v615 = vsub.f32 %v29, %v614
    %v616 = vand.u32 %v615, 4294901760
    %617 = vmatpush1.msra.mxu0 %v616
    %v618 = vand.u32 %v33, 4294901760
    %v619 = vsub.f32 %v33, %v618
    %v620 = vand.u32 %v619, 4294901760
    %621 = vmatprep.subr.mxu0 %v620
    %v622 = vand.u32 %v32, 4294901760
    %v623 = vsub.f32 %v32, %v622
    %v624 = vand.u32 %v623, 4294901760
    %625 = vmatpush1.msra.mxu0 %v624
    %v626 = vand.u32 %v36, 4294901760
    %v627 = vsub.f32 %v36, %v626
    %v628 = vand.u32 %v627, 4294901760
    %629 = vmatprep.subr.mxu0 %v628
    %v630 = vand.u32 %v35, 4294901760
    %v631 = vsub.f32 %v35, %v630
    %v632 = vand.u32 %v631, 4294901760
    %633 = vmatpush1.msra.mxu0 %v632
    %v634 = vand.u32 %v39, 4294901760
    %v635 = vsub.f32 %v39, %v634
    %v636 = vand.u32 %v635, 4294901760
    %637 = vmatprep.subr.mxu0 %v636
    %v638 = vand.u32 %v38, 4294901760
    %v639 = vsub.f32 %v38, %v638
    %v640 = vand.u32 %v639, 4294901760
    %641 = vmatpush1.msra.mxu0 %v640
    %v642 = vand.u32 %v42, 4294901760
    %v643 = vsub.f32 %v42, %v642
    %v644 = vand.u32 %v643, 4294901760
    %645 = vmatprep.subr.mxu0 %v644
    %v646 = vand.u32 %v41, 4294901760
    %v647 = vsub.f32 %v41, %v646
    %v648 = vand.u32 %v647, 4294901760
    %649 = vmatpush1.msra.mxu0 %v648
    %v650 = vand.u32 %v45, 4294901760
    %v651 = vsub.f32 %v45, %v650
    %v652 = vand.u32 %v651, 4294901760
    %653 = vmatprep.subr.mxu0 %v652
    %v654 = vand.u32 %v44, 4294901760
    %v655 = vsub.f32 %v44, %v654
    %v656 = vand.u32 %v655, 4294901760
    %657 = vmatpush1.msra.mxu0 %v656
    %v658 = vand.u32 %v48, 4294901760
    %v659 = vsub.f32 %v48, %v658
    %v660 = vand.u32 %v659, 4294901760
    %661 = vmatprep.subr.mxu0 %v660
    %v662 = vand.u32 %v47, 4294901760
    %v663 = vsub.f32 %v47, %v662
    %v664 = vand.u32 %v663, 4294901760
    %665 = vmatpush1.msra.mxu0 %v664
    %v666 = vand.u32 %v51, 4294901760
    %v667 = vsub.f32 %v51, %v666
    %v668 = vand.u32 %v667, 4294901760
    %669 = vmatprep.subr.mxu0 %v668
    %v670 = vand.u32 %v50, 4294901760
    %v671 = vsub.f32 %v50, %v670
    %v672 = vand.u32 %v671, 4294901760
    %673 = vmatpush1.msra.mxu0 %v672
    %674 = vmatprep.subr.mxu0 0.0
    %675 = vmatpush1.msra.mxu0 0.0
    %676 = vmatprep.subr.mxu0 0.0
    %677 = vmatpush1.msra.mxu0 0.0
    %678 = vmatprep.subr.mxu0 0.0
    %679 = vmatpush1.msra.mxu0 0.0
    %680 = vmatprep.subr.mxu0 0.0
    %681 = vmatpush1.msra.mxu0 0.0
    %682 = vmatprep.subr.mxu0 0.0
    %683 = vmatpush1.msra.mxu0 0.0
    %684 = vmatprep.subr.mxu0 0.0
    %685 = vmatpush1.msra.mxu0 0.0
    %686 = vmatprep.subr.mxu0 0.0
    %687 = vmatpush1.msra.mxu0 0.0
    %688 = vmatprep.subr.mxu0 0.0
    %689 = vmatpush1.msra.mxu0 0.0
    %690 = vmatprep.subr.mxu0 0.0
    %691 = vmatpush1.msra.mxu0 0.0
    %692 = vmatprep.subr.mxu0 0.0
    %693 = vmatpush1.msra.mxu0 0.0
    %694 = vmatprep.subr.mxu0 0.0
    %695 = vmatpush1.msra.mxu0 0.0
    %696 = vmatprep.subr.mxu0 0.0
    %697 = vmatpush1.msra.mxu0 0.0
    %698 = vmatprep.subr.mxu0 0.0
    %699 = vmatpush1.msra.mxu0 0.0
    %700 = vmatprep.subr.mxu0 0.0
    %701 = vmatpush1.msra.mxu0 0.0
    %702 = vmatprep.subr.mxu0 0.0
    %703 = vmatpush1.msra.mxu0 0.0
    %704 = vmatprep.subr.mxu0 0.0
    %705 = vmatpush1.msra.mxu0 0.0
    %706 = vmatprep.subr.mxu0 0.0
    %707 = vmatpush1.msra.mxu0 0.0
    %708 = vmatprep.subr.mxu0 0.0
    %709 = vmatpush1.msra.mxu0 0.0
    %710 = vmatprep.subr.mxu0 0.0
    %711 = vmatpush1.msra.mxu0 0.0
    %712 = vmatprep.subr.mxu0 0.0
    %713 = vmatpush1.msra.mxu0 0.0
    %714 = vmatprep.subr.mxu0 0.0
    %715 = vmatpush1.msra.mxu0 0.0
    %716 = vmatprep.subr.mxu0 0.0
    %717 = vmatpush1.msra.mxu0 0.0
    %718 = vmatprep.subr.mxu0 0.0
    %719 = vmatpush1.msra.mxu0 0.0
    %720 = vmatprep.subr.mxu0 0.0
    %721 = vmatpush1.msra.mxu0 0.0
    %722 = vmatprep.mubr.f32.mxu0 0.0
    %v723 = vand.u32 %v55, 4294901760
    %724 = vmatmul.mubr.f32.gmra.mrb[0].mxu0 %v723
    %v725 = vpop.f32.mrb[0].mxu0
    %v726 = vadd.f32 %v579, %v725
    %v727 = vpop.f32.mrb[0].mxu0
    %v728 = vadd.f32 %v581, %v727
    %729 = vmatprep.mubr.f32.mxu0 0.0
    %v730 = vand.u32 %v58, 4294901760
    %731 = vmatmul.mubr.f32.gmra.mrb[0].mxu0 %v730
    %v732 = vpop.f32.mrb[0].mxu0
    %v733 = vadd.f32 %v588, %v732
    %v734 = vpop.f32.mrb[0].mxu0
    %v735 = vadd.f32 %v590, %v734
    %736 = vmatprep.mubr.f32.mxu0 0.0
    %v737 = vand.u32 %v61, 4294901760
    %738 = vmatmul.mubr.f32.gmra.mrb[0].mxu0 %v737
    %v739 = vpop.f32.mrb[0].mxu0
    %v740 = vadd.f32 %v597, %v739
    %v741 = vpop.f32.mrb[0].mxu0
    %v742 = vadd.f32 %v599, %v741
    %743 = vmatprep.mubr.f32.mxu0 0.0
    %v744 = vand.u32 %v64, 4294901760
    %745 = vmatmul.mubr.f32.gmra.mrb[0].mxu0 %v744
    %v746 = vpop.f32.mrb[0].mxu0
    %v747 = vadd.f32 %v606, %v746
    %v748 = vpop.f32.mrb[0].mxu0
    %v749 = vadd.f32 %v608, %v748
    %750 = vdwg.mxu0
    %v751 = vand.u32 %v30, 4294901760
    %752 = vmatprep.subr.mxu0 %v751
    %v753 = vand.u32 %v29, 4294901760
    %754 = vmatpush1.msra.mxu0 %v753
    %v755 = vand.u32 %v33, 4294901760
    %756 = vmatprep.subr.mxu0 %v755
    %v757 = vand.u32 %v32, 4294901760
    %758 = vmatpush1.msra.mxu0 %v757
    %v759 = vand.u32 %v36, 4294901760
    %760 = vmatprep.subr.mxu0 %v759
    %v761 = vand.u32 %v35, 4294901760
    %762 = vmatpush1.msra.mxu0 %v761
    %v763 = vand.u32 %v39, 4294901760
    %764 = vmatprep.subr.mxu0 %v763
    %v765 = vand.u32 %v38, 4294901760
    %766 = vmatpush1.msra.mxu0 %v765
    %v767 = vand.u32 %v42, 4294901760
    %768 = vmatprep.subr.mxu0 %v767
    %v769 = vand.u32 %v41, 4294901760
    %770 = vmatpush1.msra.mxu0 %v769
    %v771 = vand.u32 %v45, 4294901760
    %772 = vmatprep.subr.mxu0 %v771
    %v773 = vand.u32 %v44, 4294901760
    %774 = vmatpush1.msra.mxu0 %v773
    %v775 = vand.u32 %v48, 4294901760
    %776 = vmatprep.subr.mxu0 %v775
    %v777 = vand.u32 %v47, 4294901760
    %778 = vmatpush1.msra.mxu0 %v777
    %v779 = vand.u32 %v51, 4294901760
    %780 = vmatprep.subr.mxu0 %v779
    %v781 = vand.u32 %v50, 4294901760
    %782 = vmatpush1.msra.mxu0 %v781
    %783 = vmatprep.subr.mxu0 0.0
    %784 = vmatpush1.msra.mxu0 0.0
    %785 = vmatprep.subr.mxu0 0.0
    %786 = vmatpush1.msra.mxu0 0.0
    %787 = vmatprep.subr.mxu0 0.0
    %788 = vmatpush1.msra.mxu0 0.0
    %789 = vmatprep.subr.mxu0 0.0
    %790 = vmatpush1.msra.mxu0 0.0
    %791 = vmatprep.subr.mxu0 0.0
    %792 = vmatpush1.msra.mxu0 0.0
    %793 = vmatprep.subr.mxu0 0.0
    %794 = vmatpush1.msra.mxu0 0.0
    %795 = vmatprep.subr.mxu0 0.0
    %796 = vmatpush1.msra.mxu0 0.0
    %797 = vmatprep.subr.mxu0 0.0
    %798 = vmatpush1.msra.mxu0 0.0
    %799 = vmatprep.subr.mxu0 0.0
    %800 = vmatpush1.msra.mxu0 0.0
    %801 = vmatprep.subr.mxu0 0.0
    %802 = vmatpush1.msra.mxu0 0.0
    %803 = vmatprep.subr.mxu0 0.0
    %804 = vmatpush1.msra.mxu0 0.0
    %805 = vmatprep.subr.mxu0 0.0
    %806 = vmatpush1.msra.mxu0 0.0
    %807 = vmatprep.subr.mxu0 0.0
    %808 = vmatpush1.msra.mxu0 0.0
    %809 = vmatprep.subr.mxu0 0.0
    %810 = vmatpush1.msra.mxu0 0.0
    %811 = vmatprep.subr.mxu0 0.0
    %812 = vmatpush1.msra.mxu0 0.0
    %813 = vmatprep.subr.mxu0 0.0
    %814 = vmatpush1.msra.mxu0 0.0
    %815 = vmatprep.subr.mxu0 0.0
    %816 = vmatpush1.msra.mxu0 0.0
    %817 = vmatprep.subr.mxu0 0.0
    %818 = vmatpush1.msra.mxu0 0.0
    %819 = vmatprep.subr.mxu0 0.0
    %820 = vmatpush1.msra.mxu0 0.0
    %821 = vmatprep.subr.mxu0 0.0
    %822 = vmatpush1.msra.mxu0 0.0
    %823 = vmatprep.subr.mxu0 0.0
    %824 = vmatpush1.msra.mxu0 0.0
    %825 = vmatprep.subr.mxu0 0.0
    %826 = vmatpush1.msra.mxu0 0.0
    %827 = vmatprep.subr.mxu0 0.0
    %828 = vmatpush1.msra.mxu0 0.0
    %829 = vmatprep.subr.mxu0 0.0
    %830 = vmatpush1.msra.mxu0 0.0
    %831 = vmatprep.mubr.f32.mxu0 0.0
    %v832 = vand.u32 %v55, 4294901760
    %833 = vmatmul.mubr.f32.gmra.mrb[0].mxu0 %v832
    %v834 = vpop.f32.mrb[0].mxu0
    %v835 = vadd.f32 %v726, %v834
    %v836 = vpop.f32.mrb[0].mxu0
    %v837 = vadd.f32 %v728, %v836
    %838 = vmatprep.mubr.f32.mxu0 0.0
    %v839 = vand.u32 %v58, 4294901760
    %840 = vmatmul.mubr.f32.gmra.mrb[0].mxu0 %v839
    %v841 = vpop.f32.mrb[0].mxu0
    %v842 = vadd.f32 %v733, %v841
    %v843 = vpop.f32.mrb[0].mxu0
    %v844 = vadd.f32 %v735, %v843
    %845 = vmatprep.mubr.f32.mxu0 0.0
    %v846 = vand.u32 %v61, 4294901760
    %847 = vmatmul.mubr.f32.gmra.mrb[0].mxu0 %v846
    %v848 = vpop.f32.mrb[0].mxu0
    %v849 = vadd.f32 %v740, %v848
    %v850 = vpop.f32.mrb[0].mxu0
    %v851 = vadd.f32 %v742, %v850
    %852 = vmatprep.mubr.f32.mxu0 0.0
    %v853 = vand.u32 %v64, 4294901760
    %854 = vmatmul.mubr.f32.gmra.mrb[0].mxu0 %v853
    %v855 = vpop.f32.mrb[0].mxu0
    %v856 = vadd.f32 %v747, %v855
    %v857 = vpop.f32.mrb[0].mxu0
    %v858 = vadd.f32 %v749, %v857
    %859 = vdwg.mxu0
    %860 = vmatprep.subr.mxu0 0.0
    %v861 = vand.u32 %v31, 4294901760
    %862 = vmatpush1.msra.mxu0 %v861
    %863 = vmatprep.subr.mxu0 0.0
    %v864 = vand.u32 %v34, 4294901760
    %865 = vmatpush1.msra.mxu0 %v864
    %866 = vmatprep.subr.mxu0 0.0
    %v867 = vand.u32 %v37, 4294901760
    %868 = vmatpush1.msra.mxu0 %v867
    %869 = vmatprep.subr.mxu0 0.0
    %v870 = vand.u32 %v40, 4294901760
    %871 = vmatpush1.msra.mxu0 %v870
    %872 = vmatprep.subr.mxu0 0.0
    %v873 = vand.u32 %v43, 4294901760
    %874 = vmatpush1.msra.mxu0 %v873
    %875 = vmatprep.subr.mxu0 0.0
    %v876 = vand.u32 %v46, 4294901760
    %877 = vmatpush1.msra.mxu0 %v876
    %878 = vmatprep.subr.mxu0 0.0
    %v879 = vand.u32 %v49, 4294901760
    %880 = vmatpush1.msra.mxu0 %v879
    %881 = vmatprep.subr.mxu0 0.0
    %v882 = vand.u32 %v52, 4294901760
    %883 = vmatpush1.msra.mxu0 %v882
    %884 = vmatprep.subr.mxu0 0.0
    %885 = vmatpush1.msra.mxu0 0.0
    %886 = vmatprep.subr.mxu0 0.0
    %887 = vmatpush1.msra.mxu0 0.0
    %888 = vmatprep.subr.mxu0 0.0
    %889 = vmatpush1.msra.mxu0 0.0
    %890 = vmatprep.subr.mxu0 0.0
    %891 = vmatpush1.msra.mxu0 0.0
    %892 = vmatprep.subr.mxu0 0.0
    %893 = vmatpush1.msra.mxu0 0.0
    %894 = vmatprep.subr.mxu0 0.0
    %895 = vmatpush1.msra.mxu0 0.0
    %896 = vmatprep.subr.mxu0 0.0
    %897 = vmatpush1.msra.mxu0 0.0
    %898 = vmatprep.subr.mxu0 0.0
    %899 = vmatpush1.msra.mxu0 0.0
    %900 = vmatprep.subr.mxu0 0.0
    %901 = vmatpush1.msra.mxu0 0.0
    %902 = vmatprep.subr.mxu0 0.0
    %903 = vmatpush1.msra.mxu0 0.0
    %904 = vmatprep.subr.mxu0 0.0
    %905 = vmatpush1.msra.mxu0 0.0
    %906 = vmatprep.subr.mxu0 0.0
    %907 = vmatpush1.msra.mxu0 0.0
    %908 = vmatprep.subr.mxu0 0.0
    %909 = vmatpush1.msra.mxu0 0.0
    %910 = vmatprep.subr.mxu0 0.0
    %911 = vmatpush1.msra.mxu0 0.0
    %912 = vmatprep.subr.mxu0 0.0
    %913 = vmatpush1.msra.mxu0 0.0
    %914 = vmatprep.subr.mxu0 0.0
    %915 = vmatpush1.msra.mxu0 0.0
    %916 = vmatprep.subr.mxu0 0.0
    %917 = vmatpush1.msra.mxu0 0.0
    %918 = vmatprep.subr.mxu0 0.0
    %919 = vmatpush1.msra.mxu0 0.0
    %920 = vmatprep.subr.mxu0 0.0
    %921 = vmatpush1.msra.mxu0 0.0
    %922 = vmatprep.subr.mxu0 0.0
    %923 = vmatpush1.msra.mxu0 0.0
    %924 = vmatprep.subr.mxu0 0.0
    %925 = vmatpush1.msra.mxu0 0.0
    %926 = vmatprep.subr.mxu0 0.0
    %927 = vmatpush1.msra.mxu0 0.0
    %928 = vmatprep.subr.mxu0 0.0
    %929 = vmatpush1.msra.mxu0 0.0
    %930 = vmatprep.subr.mxu0 0.0
    %931 = vmatpush1.msra.mxu0 0.0
    %932 = vmatprep.mubr.f32.mxu0 0.0
    %v933 = vand.u32 %v55, 4294901760
    %v934 = vsub.f32 %v55, %v933
    %v935 = vand.u32 %v934, 4294901760
    %v936 = vsub.f32 %v934, %v935
    %v937 = vand.u32 %v936, 4294901760
    %938 = vmatmul.mubr.f32.gmra.mrb[0].mxu0 %v937
    %v939 = vpop.f32.mrb[0].mxu0
    %v940 = vadd.f32 0.0, %v939
    %v941 = vpop.f32.mrb[0].mxu0
    %942 = vmatprep.mubr.f32.mxu0 0.0
    %v943 = vand.u32 %v58, 4294901760
    %v944 = vsub.f32 %v58, %v943
    %v945 = vand.u32 %v944, 4294901760
    %v946 = vsub.f32 %v944, %v945
    %v947 = vand.u32 %v946, 4294901760
    %948 = vmatmul.mubr.f32.gmra.mrb[0].mxu0 %v947
    %v949 = vpop.f32.mrb[0].mxu0
    %v950 = vadd.f32 0.0, %v949
    %v951 = vpop.f32.mrb[0].mxu0
    %952 = vmatprep.mubr.f32.mxu0 0.0
    %v953 = vand.u32 %v61, 4294901760
    %v954 = vsub.f32 %v61, %v953
    %v955 = vand.u32 %v954, 4294901760
    %v956 = vsub.f32 %v954, %v955
    %v957 = vand.u32 %v956, 4294901760
    %958 = vmatmul.mubr.f32.gmra.mrb[0].mxu0 %v957
    %v959 = vpop.f32.mrb[0].mxu0
    %v960 = vadd.f32 0.0, %v959
    %v961 = vpop.f32.mrb[0].mxu0
    %962 = vmatprep.mubr.f32.mxu0 0.0
    %v963 = vand.u32 %v64, 4294901760
    %v964 = vsub.f32 %v64, %v963
    %v965 = vand.u32 %v964, 4294901760
    %v966 = vsub.f32 %v964, %v965
    %v967 = vand.u32 %v966, 4294901760
    %968 = vmatmul.mubr.f32.gmra.mrb[0].mxu0 %v967
    %v969 = vpop.f32.mrb[0].mxu0
    %v970 = vadd.f32 0.0, %v969
    %v971 = vpop.f32.mrb[0].mxu0
    %972 = vdwg.mxu0
    %973 = vmatprep.subr.mxu0 0.0
    %v974 = vand.u32 %v31, 4294901760
    %v975 = vsub.f32 %v31, %v974
    %v976 = vand.u32 %v975, 4294901760
    %v977 = vsub.f32 %v975, %v976
    %v978 = vand.u32 %v977, 4294901760
    %979 = vmatpush1.msra.mxu0 %v978
    %980 = vmatprep.subr.mxu0 0.0
    %v981 = vand.u32 %v34, 4294901760
    %v982 = vsub.f32 %v34, %v981
    %v983 = vand.u32 %v982, 4294901760
    %v984 = vsub.f32 %v982, %v983
    %v985 = vand.u32 %v984, 4294901760
    %986 = vmatpush1.msra.mxu0 %v985
    %987 = vmatprep.subr.mxu0 0.0
    %v988 = vand.u32 %v37, 4294901760
    %v989 = vsub.f32 %v37, %v988
    %v990 = vand.u32 %v989, 4294901760
    %v991 = vsub.f32 %v989, %v990
    %v992 = vand.u32 %v991, 4294901760
    %993 = vmatpush1.msra.mxu0 %v992
    %994 = vmatprep.subr.mxu0 0.0
    %v995 = vand.u32 %v40, 4294901760
    %v996 = vsub.f32 %v40, %v995
    %v997 = vand.u32 %v996, 4294901760
    %v998 = vsub.f32 %v996, %v997
    %v999 = vand.u32 %v998, 4294901760
    %1000 = vmatpush1.msra.mxu0 %v999
    %1001 = vmatprep.subr.mxu0 0.0
    %v1002 = vand.u32 %v43, 4294901760
    %v1003 = vsub.f32 %v43, %v1002
    %v1004 = vand.u32 %v1003, 4294901760
    %v1005 = vsub.f32 %v1003, %v1004
    %v1006 = vand.u32 %v1005, 4294901760
    %1007 = vmatpush1.msra.mxu0 %v1006
    %1008 = vmatprep.subr.mxu0 0.0
    %v1009 = vand.u32 %v46, 4294901760
    %v1010 = vsub.f32 %v46, %v1009
    %v1011 = vand.u32 %v1010, 4294901760
    %v1012 = vsub.f32 %v1010, %v1011
    %v1013 = vand.u32 %v1012, 4294901760
    %1014 = vmatpush1.msra.mxu0 %v1013
    %1015 = vmatprep.subr.mxu0 0.0
    %v1016 = vand.u32 %v49, 4294901760
    %v1017 = vsub.f32 %v49, %v1016
    %v1018 = vand.u32 %v1017, 4294901760
    %v1019 = vsub.f32 %v1017, %v1018
    %v1020 = vand.u32 %v1019, 4294901760
    %1021 = vmatpush1.msra.mxu0 %v1020
    %1022 = vmatprep.subr.mxu0 0.0
    %v1023 = vand.u32 %v52, 4294901760
    %v1024 = vsub.f32 %v52, %v1023
    %v1025 = vand.u32 %v1024, 4294901760
    %v1026 = vsub.f32 %v1024, %v1025
    %v1027 = vand.u32 %v1026, 4294901760
    %1028 = vmatpush1.msra.mxu0 %v1027
    %1029 = vmatprep.subr.mxu0 0.0
    %1030 = vmatpush1.msra.mxu0 0.0
    %1031 = vmatprep.subr.mxu0 0.0
    %1032 = vmatpush1.msra.mxu0 0.0
    %1033 = vmatprep.subr.mxu0 0.0
    %1034 = vmatpush1.msra.mxu0 0.0
    %1035 = vmatprep.subr.mxu0 0.0
    %1036 = vmatpush1.msra.mxu0 0.0
    %1037 = vmatprep.subr.mxu0 0.0
    %1038 = vmatpush1.msra.mxu0 0.0
    %1039 = vmatprep.subr.mxu0 0.0
    %1040 = vmatpush1.msra.mxu0 0.0
    %1041 = vmatprep.subr.mxu0 0.0
    %1042 = vmatpush1.msra.mxu0 0.0
    %1043 = vmatprep.subr.mxu0 0.0
    %1044 = vmatpush1.msra.mxu0 0.0
    %1045 = vmatprep.subr.mxu0 0.0
    %1046 = vmatpush1.msra.mxu0 0.0
    %1047 = vmatprep.subr.mxu0 0.0
    %1048 = vmatpush1.msra.mxu0 0.0
    %1049 = vmatprep.subr.mxu0 0.0
    %1050 = vmatpush1.msra.mxu0 0.0
    %1051 = vmatprep.subr.mxu0 0.0
    %1052 = vmatpush1.msra.mxu0 0.0
    %1053 = vmatprep.subr.mxu0 0.0
    %1054 = vmatpush1.msra.mxu0 0.0
    %1055 = vmatprep.subr.mxu0 0.0
    %1056 = vmatpush1.msra.mxu0 0.0
    %1057 = vmatprep.subr.mxu0 0.0
    %1058 = vmatpush1.msra.mxu0 0.0
    %1059 = vmatprep.subr.mxu0 0.0
    %1060 = vmatpush1.msra.mxu0 0.0
    %1061 = vmatprep.subr.mxu0 0.0
    %1062 = vmatpush1.msra.mxu0 0.0
    %1063 = vmatprep.subr.mxu0 0.0
    %1064 = vmatpush1.msra.mxu0 0.0
    %1065 = vmatprep.subr.mxu0 0.0
    %1066 = vmatpush1.msra.mxu0 0.0
    %1067 = vmatprep.subr.mxu0 0.0
    %1068 = vmatpush1.msra.mxu0 0.0
    %1069 = vmatprep.subr.mxu0 0.0
    %1070 = vmatpush1.msra.mxu0 0.0
    %1071 = vmatprep.subr.mxu0 0.0
    %1072 = vmatpush1.msra.mxu0 0.0
    %1073 = vmatprep.subr.mxu0 0.0
    %1074 = vmatpush1.msra.mxu0 0.0
    %1075 = vmatprep.subr.mxu0 0.0
    %1076 = vmatpush1.msra.mxu0 0.0
    %1077 = vmatprep.mubr.f32.mxu0 0.0
    %v1078 = vand.u32 %v55, 4294901760
    %1079 = vmatmul.mubr.f32.gmra.mrb[0].mxu0 %v1078
    %v1080 = vpop.f32.mrb[0].mxu0
    %v1081 = vadd.f32 %v940, %v1080
    %v1082 = vpop.f32.mrb[0].mxu0
    %1083 = vmatprep.mubr.f32.mxu0 0.0
    %v1084 = vand.u32 %v58, 4294901760
    %1085 = vmatmul.mubr.f32.gmra.mrb[0].mxu0 %v1084
    %v1086 = vpop.f32.mrb[0].mxu0
    %v1087 = vadd.f32 %v950, %v1086
    %v1088 = vpop.f32.mrb[0].mxu0
    %1089 = vmatprep.mubr.f32.mxu0 0.0
    %v1090 = vand.u32 %v61, 4294901760
    %1091 = vmatmul.mubr.f32.gmra.mrb[0].mxu0 %v1090
    %v1092 = vpop.f32.mrb[0].mxu0
    %v1093 = vadd.f32 %v960, %v1092
    %v1094 = vpop.f32.mrb[0].mxu0
    %1095 = vmatprep.mubr.f32.mxu0 0.0
    %v1096 = vand.u32 %v64, 4294901760
    %1097 = vmatmul.mubr.f32.gmra.mrb[0].mxu0 %v1096
    %v1098 = vpop.f32.mrb[0].mxu0
    %v1099 = vadd.f32 %v970, %v1098
    %v1100 = vpop.f32.mrb[0].mxu0
    %1101 = vdwg.mxu0
    %1102 = vmatprep.subr.mxu0 0.0
    %v1103 = vand.u32 %v31, 4294901760
    %v1104 = vsub.f32 %v31, %v1103
    %1105 = vmatpush1.msra.mxu0 %v1104
    %1106 = vmatprep.subr.mxu0 0.0
    %v1107 = vand.u32 %v34, 4294901760
    %v1108 = vsub.f32 %v34, %v1107
    %1109 = vmatpush1.msra.mxu0 %v1108
    %1110 = vmatprep.subr.mxu0 0.0
    %v1111 = vand.u32 %v37, 4294901760
    %v1112 = vsub.f32 %v37, %v1111
    %1113 = vmatpush1.msra.mxu0 %v1112
    %1114 = vmatprep.subr.mxu0 0.0
    %v1115 = vand.u32 %v40, 4294901760
    %v1116 = vsub.f32 %v40, %v1115
    %1117 = vmatpush1.msra.mxu0 %v1116
    %1118 = vmatprep.subr.mxu0 0.0
    %v1119 = vand.u32 %v43, 4294901760
    %v1120 = vsub.f32 %v43, %v1119
    %1121 = vmatpush1.msra.mxu0 %v1120
    %1122 = vmatprep.subr.mxu0 0.0
    %v1123 = vand.u32 %v46, 4294901760
    %v1124 = vsub.f32 %v46, %v1123
    %1125 = vmatpush1.msra.mxu0 %v1124
    %1126 = vmatprep.subr.mxu0 0.0
    %v1127 = vand.u32 %v49, 4294901760
    %v1128 = vsub.f32 %v49, %v1127
    %1129 = vmatpush1.msra.mxu0 %v1128
    %1130 = vmatprep.subr.mxu0 0.0
    %v1131 = vand.u32 %v52, 4294901760
    %v1132 = vsub.f32 %v52, %v1131
    %1133 = vmatpush1.msra.mxu0 %v1132
    %1134 = vmatprep.subr.mxu0 0.0
    %1135 = vmatpush1.msra.mxu0 0.0
    %1136 = vmatprep.subr.mxu0 0.0
    %1137 = vmatpush1.msra.mxu0 0.0
    %1138 = vmatprep.subr.mxu0 0.0
    %1139 = vmatpush1.msra.mxu0 0.0
    %1140 = vmatprep.subr.mxu0 0.0
    %1141 = vmatpush1.msra.mxu0 0.0
    %1142 = vmatprep.subr.mxu0 0.0
    %1143 = vmatpush1.msra.mxu0 0.0
    %1144 = vmatprep.subr.mxu0 0.0
    %1145 = vmatpush1.msra.mxu0 0.0
    %1146 = vmatprep.subr.mxu0 0.0
    %1147 = vmatpush1.msra.mxu0 0.0
    %1148 = vmatprep.subr.mxu0 0.0
    %1149 = vmatpush1.msra.mxu0 0.0
    %1150 = vmatprep.subr.mxu0 0.0
    %1151 = vmatpush1.msra.mxu0 0.0
    %1152 = vmatprep.subr.mxu0 0.0
    %1153 = vmatpush1.msra.mxu0 0.0
    %1154 = vmatprep.subr.mxu0 0.0
    %1155 = vmatpush1.msra.mxu0 0.0
    %1156 = vmatprep.subr.mxu0 0.0
    %1157 = vmatpush1.msra.mxu0 0.0
    %1158 = vmatprep.subr.mxu0 0.0
    %1159 = vmatpush1.msra.mxu0 0.0
    %1160 = vmatprep.subr.mxu0 0.0
    %1161 = vmatpush1.msra.mxu0 0.0
    %1162 = vmatprep.subr.mxu0 0.0
    %1163 = vmatpush1.msra.mxu0 0.0
    %1164 = vmatprep.subr.mxu0 0.0
    %1165 = vmatpush1.msra.mxu0 0.0
    %1166 = vmatprep.subr.mxu0 0.0
    %1167 = vmatpush1.msra.mxu0 0.0
    %1168 = vmatprep.subr.mxu0 0.0
    %1169 = vmatpush1.msra.mxu0 0.0
    %1170 = vmatprep.subr.mxu0 0.0
    %1171 = vmatpush1.msra.mxu0 0.0
    %1172 = vmatprep.subr.mxu0 0.0
    %1173 = vmatpush1.msra.mxu0 0.0
    %1174 = vmatprep.subr.mxu0 0.0
    %1175 = vmatpush1.msra.mxu0 0.0
    %1176 = vmatprep.subr.mxu0 0.0
    %1177 = vmatpush1.msra.mxu0 0.0
    %1178 = vmatprep.subr.mxu0 0.0
    %1179 = vmatpush1.msra.mxu0 0.0
    %1180 = vmatprep.subr.mxu0 0.0
    %1181 = vmatpush1.msra.mxu0 0.0
    %1182 = vmatprep.mubr.f32.mxu0 0.0
    %v1183 = vand.u32 %v55, 4294901760
    %v1184 = vsub.f32 %v55, %v1183
    %1185 = vmatmul.mubr.f32.gmra.mrb[0].mxu0 %v1184
    %v1186 = vpop.f32.mrb[0].mxu0
    %v1187 = vadd.f32 %v1081, %v1186
    %v1188 = vpop.f32.mrb[0].mxu0
    %1189 = vmatprep.mubr.f32.mxu0 0.0
    %v1190 = vand.u32 %v58, 4294901760
    %v1191 = vsub.f32 %v58, %v1190
    %1192 = vmatmul.mubr.f32.gmra.mrb[0].mxu0 %v1191
    %v1193 = vpop.f32.mrb[0].mxu0
    %v1194 = vadd.f32 %v1087, %v1193
    %v1195 = vpop.f32.mrb[0].mxu0
    %1196 = vmatprep.mubr.f32.mxu0 0.0
    %v1197 = vand.u32 %v61, 4294901760
    %v1198 = vsub.f32 %v61, %v1197
    %1199 = vmatmul.mubr.f32.gmra.mrb[0].mxu0 %v1198
    %v1200 = vpop.f32.mrb[0].mxu0
    %v1201 = vadd.f32 %v1093, %v1200
    %v1202 = vpop.f32.mrb[0].mxu0
    %1203 = vmatprep.mubr.f32.mxu0 0.0
    %v1204 = vand.u32 %v64, 4294901760
    %v1205 = vsub.f32 %v64, %v1204
    %1206 = vmatmul.mubr.f32.gmra.mrb[0].mxu0 %v1205
    %v1207 = vpop.f32.mrb[0].mxu0
    %v1208 = vadd.f32 %v1099, %v1207
    %v1209 = vpop.f32.mrb[0].mxu0
    %1210 = vdwg.mxu0
    %1211 = vmatprep.subr.mxu0 0.0
    %v1212 = vand.u32 %v31, 4294901760
    %1213 = vmatpush1.msra.mxu0 %v1212
    %1214 = vmatprep.subr.mxu0 0.0
    %v1215 = vand.u32 %v34, 4294901760
    %1216 = vmatpush1.msra.mxu0 %v1215
    %1217 = vmatprep.subr.mxu0 0.0
    %v1218 = vand.u32 %v37, 4294901760
    %1219 = vmatpush1.msra.mxu0 %v1218
    %1220 = vmatprep.subr.mxu0 0.0
    %v1221 = vand.u32 %v40, 4294901760
    %1222 = vmatpush1.msra.mxu0 %v1221
    %1223 = vmatprep.subr.mxu0 0.0
    %v1224 = vand.u32 %v43, 4294901760
    %1225 = vmatpush1.msra.mxu0 %v1224
    %1226 = vmatprep.subr.mxu0 0.0
    %v1227 = vand.u32 %v46, 4294901760
    %1228 = vmatpush1.msra.mxu0 %v1227
    %1229 = vmatprep.subr.mxu0 0.0
    %v1230 = vand.u32 %v49, 4294901760
    %1231 = vmatpush1.msra.mxu0 %v1230
    %1232 = vmatprep.subr.mxu0 0.0
    %v1233 = vand.u32 %v52, 4294901760
    %1234 = vmatpush1.msra.mxu0 %v1233
    %1235 = vmatprep.subr.mxu0 0.0
    %1236 = vmatpush1.msra.mxu0 0.0
    %1237 = vmatprep.subr.mxu0 0.0
    %1238 = vmatpush1.msra.mxu0 0.0
    %1239 = vmatprep.subr.mxu0 0.0
    %1240 = vmatpush1.msra.mxu0 0.0
    %1241 = vmatprep.subr.mxu0 0.0
    %1242 = vmatpush1.msra.mxu0 0.0
    %1243 = vmatprep.subr.mxu0 0.0
    %1244 = vmatpush1.msra.mxu0 0.0
    %1245 = vmatprep.subr.mxu0 0.0
    %1246 = vmatpush1.msra.mxu0 0.0
    %1247 = vmatprep.subr.mxu0 0.0
    %1248 = vmatpush1.msra.mxu0 0.0
    %1249 = vmatprep.subr.mxu0 0.0
    %1250 = vmatpush1.msra.mxu0 0.0
    %1251 = vmatprep.subr.mxu0 0.0
    %1252 = vmatpush1.msra.mxu0 0.0
    %1253 = vmatprep.subr.mxu0 0.0
    %1254 = vmatpush1.msra.mxu0 0.0
    %1255 = vmatprep.subr.mxu0 0.0
    %1256 = vmatpush1.msra.mxu0 0.0
    %1257 = vmatprep.subr.mxu0 0.0
    %1258 = vmatpush1.msra.mxu0 0.0
    %1259 = vmatprep.subr.mxu0 0.0
    %1260 = vmatpush1.msra.mxu0 0.0
    %1261 = vmatprep.subr.mxu0 0.0
    %1262 = vmatpush1.msra.mxu0 0.0
    %1263 = vmatprep.subr.mxu0 0.0
    %1264 = vmatpush1.msra.mxu0 0.0
    %1265 = vmatprep.subr.mxu0 0.0
    %1266 = vmatpush1.msra.mxu0 0.0
    %1267 = vmatprep.subr.mxu0 0.0
    %1268 = vmatpush1.msra.mxu0 0.0
    %1269 = vmatprep.subr.mxu0 0.0
    %1270 = vmatpush1.msra.mxu0 0.0
    %1271 = vmatprep.subr.mxu0 0.0
    %1272 = vmatpush1.msra.mxu0 0.0
    %1273 = vmatprep.subr.mxu0 0.0
    %1274 = vmatpush1.msra.mxu0 0.0
    %1275 = vmatprep.subr.mxu0 0.0
    %1276 = vmatpush1.msra.mxu0 0.0
    %1277 = vmatprep.subr.mxu0 0.0
    %1278 = vmatpush1.msra.mxu0 0.0
    %1279 = vmatprep.subr.mxu0 0.0
    %1280 = vmatpush1.msra.mxu0 0.0
    %1281 = vmatprep.subr.mxu0 0.0
    %1282 = vmatpush1.msra.mxu0 0.0
    %1283 = vmatprep.mubr.f32.mxu0 0.0
    %v1284 = vand.u32 %v55, 4294901760
    %v1285 = vsub.f32 %v55, %v1284
    %v1286 = vand.u32 %v1285, 4294901760
    %1287 = vmatmul.mubr.f32.gmra.mrb[0].mxu0 %v1286
    %v1288 = vpop.f32.mrb[0].mxu0
    %v1289 = vadd.f32 %v1187, %v1288
    %v1290 = vpop.f32.mrb[0].mxu0
    %1291 = vmatprep.mubr.f32.mxu0 0.0
    %v1292 = vand.u32 %v58, 4294901760
    %v1293 = vsub.f32 %v58, %v1292
    %v1294 = vand.u32 %v1293, 4294901760
    %1295 = vmatmul.mubr.f32.gmra.mrb[0].mxu0 %v1294
    %v1296 = vpop.f32.mrb[0].mxu0
    %v1297 = vadd.f32 %v1194, %v1296
    %v1298 = vpop.f32.mrb[0].mxu0
    %1299 = vmatprep.mubr.f32.mxu0 0.0
    %v1300 = vand.u32 %v61, 4294901760
    %v1301 = vsub.f32 %v61, %v1300
    %v1302 = vand.u32 %v1301, 4294901760
    %1303 = vmatmul.mubr.f32.gmra.mrb[0].mxu0 %v1302
    %v1304 = vpop.f32.mrb[0].mxu0
    %v1305 = vadd.f32 %v1201, %v1304
    %v1306 = vpop.f32.mrb[0].mxu0
    %1307 = vmatprep.mubr.f32.mxu0 0.0
    %v1308 = vand.u32 %v64, 4294901760
    %v1309 = vsub.f32 %v64, %v1308
    %v1310 = vand.u32 %v1309, 4294901760
    %1311 = vmatmul.mubr.f32.gmra.mrb[0].mxu0 %v1310
    %v1312 = vpop.f32.mrb[0].mxu0
    %v1313 = vadd.f32 %v1208, %v1312
    %v1314 = vpop.f32.mrb[0].mxu0
    %1315 = vdwg.mxu0
    %1316 = vmatprep.subr.mxu0 0.0
    %v1317 = vand.u32 %v31, 4294901760
    %v1318 = vsub.f32 %v31, %v1317
    %v1319 = vand.u32 %v1318, 4294901760
    %1320 = vmatpush1.msra.mxu0 %v1319
    %1321 = vmatprep.subr.mxu0 0.0
    %v1322 = vand.u32 %v34, 4294901760
    %v1323 = vsub.f32 %v34, %v1322
    %v1324 = vand.u32 %v1323, 4294901760
    %1325 = vmatpush1.msra.mxu0 %v1324
    %1326 = vmatprep.subr.mxu0 0.0
    %v1327 = vand.u32 %v37, 4294901760
    %v1328 = vsub.f32 %v37, %v1327
    %v1329 = vand.u32 %v1328, 4294901760
    %1330 = vmatpush1.msra.mxu0 %v1329
    %1331 = vmatprep.subr.mxu0 0.0
    %v1332 = vand.u32 %v40, 4294901760
    %v1333 = vsub.f32 %v40, %v1332
    %v1334 = vand.u32 %v1333, 4294901760
    %1335 = vmatpush1.msra.mxu0 %v1334
    %1336 = vmatprep.subr.mxu0 0.0
    %v1337 = vand.u32 %v43, 4294901760
    %v1338 = vsub.f32 %v43, %v1337
    %v1339 = vand.u32 %v1338, 4294901760
    %1340 = vmatpush1.msra.mxu0 %v1339
    %1341 = vmatprep.subr.mxu0 0.0
    %v1342 = vand.u32 %v46, 4294901760
    %v1343 = vsub.f32 %v46, %v1342
    %v1344 = vand.u32 %v1343, 4294901760
    %1345 = vmatpush1.msra.mxu0 %v1344
    %1346 = vmatprep.subr.mxu0 0.0
    %v1347 = vand.u32 %v49, 4294901760
    %v1348 = vsub.f32 %v49, %v1347
    %v1349 = vand.u32 %v1348, 4294901760
    %1350 = vmatpush1.msra.mxu0 %v1349
    %1351 = vmatprep.subr.mxu0 0.0
    %v1352 = vand.u32 %v52, 4294901760
    %v1353 = vsub.f32 %v52, %v1352
    %v1354 = vand.u32 %v1353, 4294901760
    %1355 = vmatpush1.msra.mxu0 %v1354
    %1356 = vmatprep.subr.mxu0 0.0
    %1357 = vmatpush1.msra.mxu0 0.0
    %1358 = vmatprep.subr.mxu0 0.0
    %1359 = vmatpush1.msra.mxu0 0.0
    %1360 = vmatprep.subr.mxu0 0.0
    %1361 = vmatpush1.msra.mxu0 0.0
    %1362 = vmatprep.subr.mxu0 0.0
    %1363 = vmatpush1.msra.mxu0 0.0
    %1364 = vmatprep.subr.mxu0 0.0
    %1365 = vmatpush1.msra.mxu0 0.0
    %1366 = vmatprep.subr.mxu0 0.0
    %1367 = vmatpush1.msra.mxu0 0.0
    %1368 = vmatprep.subr.mxu0 0.0
    %1369 = vmatpush1.msra.mxu0 0.0
    %1370 = vmatprep.subr.mxu0 0.0
    %1371 = vmatpush1.msra.mxu0 0.0
    %1372 = vmatprep.subr.mxu0 0.0
    %1373 = vmatpush1.msra.mxu0 0.0
    %1374 = vmatprep.subr.mxu0 0.0
    %1375 = vmatpush1.msra.mxu0 0.0
    %1376 = vmatprep.subr.mxu0 0.0
    %1377 = vmatpush1.msra.mxu0 0.0
    %1378 = vmatprep.subr.mxu0 0.0
    %1379 = vmatpush1.msra.mxu0 0.0
    %1380 = vmatprep.subr.mxu0 0.0
    %1381 = vmatpush1.msra.mxu0 0.0
    %1382 = vmatprep.subr.mxu0 0.0
    %1383 = vmatpush1.msra.mxu0 0.0
    %1384 = vmatprep.subr.mxu0 0.0
    %1385 = vmatpush1.msra.mxu0 0.0
    %1386 = vmatprep.subr.mxu0 0.0
    %1387 = vmatpush1.msra.mxu0 0.0
    %1388 = vmatprep.subr.mxu0 0.0
    %1389 = vmatpush1.msra.mxu0 0.0
    %1390 = vmatprep.subr.mxu0 0.0
    %1391 = vmatpush1.msra.mxu0 0.0
    %1392 = vmatprep.subr.mxu0 0.0
    %1393 = vmatpush1.msra.mxu0 0.0
    %1394 = vmatprep.subr.mxu0 0.0
    %1395 = vmatpush1.msra.mxu0 0.0
    %1396 = vmatprep.subr.mxu0 0.0
    %1397 = vmatpush1.msra.mxu0 0.0
    %1398 = vmatprep.subr.mxu0 0.0
    %1399 = vmatpush1.msra.mxu0 0.0
    %1400 = vmatprep.subr.mxu0 0.0
    %1401 = vmatpush1.msra.mxu0 0.0
    %1402 = vmatprep.subr.mxu0 0.0
    %1403 = vmatpush1.msra.mxu0 0.0
    %1404 = vmatprep.mubr.f32.mxu0 0.0
    %v1405 = vand.u32 %v55, 4294901760
    %1406 = vmatmul.mubr.f32.gmra.mrb[0].mxu0 %v1405
    %v1407 = vpop.f32.mrb[0].mxu0
    %v1408 = vadd.f32 %v1289, %v1407
    %v1409 = vpop.f32.mrb[0].mxu0
    %1410 = vmatprep.mubr.f32.mxu0 0.0
    %v1411 = vand.u32 %v58, 4294901760
    %1412 = vmatmul.mubr.f32.gmra.mrb[0].mxu0 %v1411
    %v1413 = vpop.f32.mrb[0].mxu0
    %v1414 = vadd.f32 %v1297, %v1413
    %v1415 = vpop.f32.mrb[0].mxu0
    %1416 = vmatprep.mubr.f32.mxu0 0.0
    %v1417 = vand.u32 %v61, 4294901760
    %1418 = vmatmul.mubr.f32.gmra.mrb[0].mxu0 %v1417
    %v1419 = vpop.f32.mrb[0].mxu0
    %v1420 = vadd.f32 %v1305, %v1419
    %v1421 = vpop.f32.mrb[0].mxu0
    %1422 = vmatprep.mubr.f32.mxu0 0.0
    %v1423 = vand.u32 %v64, 4294901760
    %1424 = vmatmul.mubr.f32.gmra.mrb[0].mxu0 %v1423
    %v1425 = vpop.f32.mrb[0].mxu0
    %v1426 = vadd.f32 %v1313, %v1425
    %v1427 = vpop.f32.mrb[0].mxu0
    %1428 = vdwg.mxu0
    %1429 = vmatprep.subr.mxu0 0.0
    %v1430 = vand.u32 %v31, 4294901760
    %1431 = vmatpush1.msra.mxu0 %v1430
    %1432 = vmatprep.subr.mxu0 0.0
    %v1433 = vand.u32 %v34, 4294901760
    %1434 = vmatpush1.msra.mxu0 %v1433
    %1435 = vmatprep.subr.mxu0 0.0
    %v1436 = vand.u32 %v37, 4294901760
    %1437 = vmatpush1.msra.mxu0 %v1436
    %1438 = vmatprep.subr.mxu0 0.0
    %v1439 = vand.u32 %v40, 4294901760
    %1440 = vmatpush1.msra.mxu0 %v1439
    %1441 = vmatprep.subr.mxu0 0.0
    %v1442 = vand.u32 %v43, 4294901760
    %1443 = vmatpush1.msra.mxu0 %v1442
    %1444 = vmatprep.subr.mxu0 0.0
    %v1445 = vand.u32 %v46, 4294901760
    %1446 = vmatpush1.msra.mxu0 %v1445
    %1447 = vmatprep.subr.mxu0 0.0
    %v1448 = vand.u32 %v49, 4294901760
    %1449 = vmatpush1.msra.mxu0 %v1448
    %1450 = vmatprep.subr.mxu0 0.0
    %v1451 = vand.u32 %v52, 4294901760
    %1452 = vmatpush1.msra.mxu0 %v1451
    %1453 = vmatprep.subr.mxu0 0.0
    %1454 = vmatpush1.msra.mxu0 0.0
    %1455 = vmatprep.subr.mxu0 0.0
    %1456 = vmatpush1.msra.mxu0 0.0
    %1457 = vmatprep.subr.mxu0 0.0
    %1458 = vmatpush1.msra.mxu0 0.0
    %1459 = vmatprep.subr.mxu0 0.0
    %1460 = vmatpush1.msra.mxu0 0.0
    %1461 = vmatprep.subr.mxu0 0.0
    %1462 = vmatpush1.msra.mxu0 0.0
    %1463 = vmatprep.subr.mxu0 0.0
    %1464 = vmatpush1.msra.mxu0 0.0
    %1465 = vmatprep.subr.mxu0 0.0
    %1466 = vmatpush1.msra.mxu0 0.0
    %1467 = vmatprep.subr.mxu0 0.0
    %1468 = vmatpush1.msra.mxu0 0.0
    %1469 = vmatprep.subr.mxu0 0.0
    %1470 = vmatpush1.msra.mxu0 0.0
    %1471 = vmatprep.subr.mxu0 0.0
    %1472 = vmatpush1.msra.mxu0 0.0
    %1473 = vmatprep.subr.mxu0 0.0
    %1474 = vmatpush1.msra.mxu0 0.0
    %1475 = vmatprep.subr.mxu0 0.0
    %1476 = vmatpush1.msra.mxu0 0.0
    %1477 = vmatprep.subr.mxu0 0.0
    %1478 = vmatpush1.msra.mxu0 0.0
    %1479 = vmatprep.subr.mxu0 0.0
    %1480 = vmatpush1.msra.mxu0 0.0
    %1481 = vmatprep.subr.mxu0 0.0
    %1482 = vmatpush1.msra.mxu0 0.0
    %1483 = vmatprep.subr.mxu0 0.0
    %1484 = vmatpush1.msra.mxu0 0.0
    %1485 = vmatprep.subr.mxu0 0.0
    %1486 = vmatpush1.msra.mxu0 0.0
    %1487 = vmatprep.subr.mxu0 0.0
    %1488 = vmatpush1.msra.mxu0 0.0
    %1489 = vmatprep.subr.mxu0 0.0
    %1490 = vmatpush1.msra.mxu0 0.0
    %1491 = vmatprep.subr.mxu0 0.0
    %1492 = vmatpush1.msra.mxu0 0.0
    %1493 = vmatprep.subr.mxu0 0.0
    %1494 = vmatpush1.msra.mxu0 0.0
    %1495 = vmatprep.subr.mxu0 0.0
    %1496 = vmatpush1.msra.mxu0 0.0
    %1497 = vmatprep.subr.mxu0 0.0
    %1498 = vmatpush1.msra.mxu0 0.0
    %1499 = vmatprep.subr.mxu0 0.0
    %1500 = vmatpush1.msra.mxu0 0.0
    %1501 = vmatprep.mubr.f32.mxu0 0.0
    %v1502 = vand.u32 %v55, 4294901760
    %1503 = vmatmul.mubr.f32.gmra.mrb[0].mxu0 %v1502
    %v1504 = vpop.f32.mrb[0].mxu0
    %v1505 = vadd.f32 %v1408, %v1504
    %v1506 = vpop.f32.mrb[0].mxu0
    %1507 = vmatprep.mubr.f32.mxu0 0.0
    %v1508 = vand.u32 %v58, 4294901760
    %1509 = vmatmul.mubr.f32.gmra.mrb[0].mxu0 %v1508
    %v1510 = vpop.f32.mrb[0].mxu0
    %v1511 = vadd.f32 %v1414, %v1510
    %v1512 = vpop.f32.mrb[0].mxu0
    %1513 = vmatprep.mubr.f32.mxu0 0.0
    %v1514 = vand.u32 %v61, 4294901760
    %1515 = vmatmul.mubr.f32.gmra.mrb[0].mxu0 %v1514
    %v1516 = vpop.f32.mrb[0].mxu0
    %v1517 = vadd.f32 %v1420, %v1516
    %v1518 = vpop.f32.mrb[0].mxu0
    %1519 = vmatprep.mubr.f32.mxu0 0.0
    %v1520 = vand.u32 %v64, 4294901760
    %1521 = vmatmul.mubr.f32.gmra.mrb[0].mxu0 %v1520
    %v1522 = vpop.f32.mrb[0].mxu0
    %v1523 = vadd.f32 %v1426, %v1522
    %v1524 = vpop.f32.mrb[0].mxu0
    %1525 = vdwg.mxu0
    %1526 = vst [vmem:[%s2] sm:$0xff] %v835
    %1527 = vst [vmem:[%s2 + $0x8] sm:$0xff] %v837
    %1528 = vst [vmem:[%s2 + $0x10] sm:$0xff] %v1505
    %1529 = vst [vmem:[%s2 + $0x18] sm:$0xff] %v842
    %1530 = vst [vmem:[%s2 + $0x20] sm:$0xff] %v844
    %1531 = vst [vmem:[%s2 + $0x28] sm:$0xff] %v1511
    %1532 = vst [vmem:[%s2 + $0x30] sm:$0xff] %v849
    %1533 = vst [vmem:[%s2 + $0x38] sm:$0xff] %v851
    %1534 = vst [vmem:[%s2 + $0x40] sm:$0xff] %v1517
    %1535 = vst [vmem:[%s2 + $0x48] sm:$0xff] %v856
    %1536 = vst [vmem:[%s2 + $0x50] sm:$0xff] %v858
    %1537 = vst [vmem:[%s2 + $0x58] sm:$0xff] %v1523
    // Predicated region
    $region14: #{forward.1} parent=1 // pred_check
      _
    $region15: #{forward.1} parent=1 // pred_check_branch
      %1539 = sbr.rel (0) target = $region17
    $region16: #{forward.1} parent=1 // pred_region
      _
    $region17: #{forward.1} parent=1 // pred_fallthru
      _
    // Predicated region
    $region18: #{forward.1} parent=1 // pred_check
      _
    $region19: #{forward.1} parent=1 // pred_check_branch
      %1541 = sbr.rel (0) target = $region21
    $region20: #{forward.1} parent=1 // pred_region
      _
    $region21: #{forward.1} parent=1 // pred_fallthru
      _
    %1542 = vsyncpa [#allocation3], 1

</llo_original>
